<compile_context>
chip_gen: v7x
topology: tpu7x:2x2x1
jax: 0.10.0
libtpu: 0.0.40
codegen_flags: <defaults>
</compile_context>

<pallas_src>
import functools

import jax
import jax.numpy as jnp
from jax import lax
from jax.experimental import pallas as pl
from jax.experimental.pallas import tpu as pltpu


# ---------------------------------------------------------------------------
# Pallas kernel: in-kernel tap gather + one fused branch matmul per grid step
# ---------------------------------------------------------------------------
def _fused_branch_kernel(ps_ref, w_ref, o_ref, *, n_shift, wsplit, l_out):
    # ps_ref: (p*p*Cin, L_in2) bf16  phase-split input strip (with halo rows)
    # w_ref : (P2*Cout, n_shift^2 * p*p*Cin) bf16  scattered conv weights
    # o_ref : (P2*Cout, l_out) f32
    x = ps_ref[...]
    pieces = []
    for uy in range(n_shift):
        for ux in range(n_shift):
            s = uy * wsplit + ux                      # static lane offset
            pieces.append(x[:, s:s + l_out])          # shifted tap slab
    stacked = jnp.concatenate(pieces, axis=0)         # (nS, l_out) bf16
    o_ref[...] = jnp.dot(w_ref[...], stacked,
                         preferred_element_type=jnp.float32)


def _choose_row_tile(Ho, Wsplit, pc, n_out_rows, sh, budget_bytes=4 << 20):
    # largest divisor of Ho whose (double-buffered) blocks stay well under VMEM
    best = 1
    for th in range(1, Ho + 1):
        if Ho % th:
            continue
        blk = pc * ((th + sh) * Wsplit + sh) * 2 + n_out_rows * th * Wsplit * 4
        if 2 * blk <= budget_bytes:
            best = th
    return best


# ---------------------------------------------------------------------------
# DiffPadConv forward (layout plumbing in JAX, hot path in Pallas)
# ---------------------------------------------------------------------------
def diff_pad_conv(x_nchw, weights, kernel_size, n_phase, row_tile=None):
    """
    x_nchw : (B, Cin, H, W) float32
    weights: (n_phase**2, Cout, Cin, k, k) float32, branch index = i*n_phase+j
    """
    B, Cin, H, W = x_nchw.shape
    P2, Cout = weights.shape[0], weights.shape[1]
    k, p = kernel_size, n_phase
    assert H % p == 0 and W % p == 0
    Ho, Wo = H // p, W // p
    sh = (k + p - 2) // p                 # max extra row/col shift after split
    n_shift = sh + 1
    Hsplit, Wsplit = Ho + sh, Wo + sh
    PC = p * p * Cin
    # TODO(synk): negative ReplicationPad2d entries (cropping) are not handled;
    # the (k=3, n_phase=2) configuration used here never produces them.

    # ---- ONE replication pad that covers every branch (was 4 padded copies) --
    top = left = k // 2
    bottom = p * Hsplit - H - top
    right = p * Wsplit - W - left
    xp = jnp.pad(x_nchw, ((0, 0), (0, 0), (top, bottom), (left, right)),
                 mode="edge")                         # (B, Cin, p*Hsplit, p*Wsplit)

    # ---- phase split (stride-p decimation): ~1x the input bytes, bf16 -------
    ps = xp.reshape(B, Cin, Hsplit, p, Wsplit, p)
    ps = jnp.transpose(ps, (0, 3, 5, 1, 2, 4))        # (B, p, p, Cin, Hsplit, Wsplit)

    # ---- row tiling with an sh-row halo duplicated per tile ------------------
    if row_tile is None:
        row_tile = _choose_row_tile(Ho, Wsplit, PC, P2 * Cout, sh)
    TH = row_tile
    T = Ho // TH
    tiles = [ps[:, :, :, :, t * TH: t * TH + TH + sh, :] for t in range(T)]
    pst = jnp.stack(tiles, axis=1)                    # (B, T, p, p, Cin, TH+sh, Wsplit)
    L_in = (TH + sh) * Wsplit
    L_out = TH * Wsplit
    pst = pst.reshape(B, T, PC, L_in)
    pst = jnp.pad(pst, ((0, 0), (0, 0), (0, 0), (0, sh)))   # tail pad: shifted slices stay in-bounds
    L_in2 = L_in + sh
    pst = pst.astype(jnp.bfloat16)

    # ---- scatter conv weights into the fused, resident (P2*Cout, nS) matrix --
    nS = n_shift * n_shift * p * p * Cin
    wt = jnp.zeros((P2 * Cout, nS), jnp.float32)
    for i in range(p):
        for j in range(p):
            b = i * p + j
            for dy in range(k):
                for dx in range(k):
                    a, c = dy + i, dx + j             # total row/col offsets
                    col = ((((a // p) * n_shift + (c // p)) * (p * p))
                           + (a % p) * p + (c % p)) * Cin
                    wt = wt.at[b * Cout:(b + 1) * Cout, col:col + Cin].set(
                        weights[b, :, :, dy, dx])
    wt = wt.astype(jnp.bfloat16)

    kernel = functools.partial(_fused_branch_kernel, n_shift=n_shift,
                               wsplit=Wsplit, l_out=L_out)

    blk_in = PC * L_in2 * 2
    blk_out = P2 * Cout * L_out * 4
    blk_w = P2 * Cout * nS * 2
    vmem_limit = min(2 * (blk_in + blk_out + blk_w) + (16 << 20), 100 << 20)
    bytes_accessed = pst.size * 2 + wt.size * 2 + B * T * P2 * Cout * L_out * 4

    out = pl.pallas_call(
        kernel,
        out_shape=jax.ShapeDtypeStruct((B, T, P2 * Cout, L_out), jnp.float32),
        grid_spec=pltpu.PrefetchScalarGridSpec(
            num_scalar_prefetch=0,
            grid=(B, T),
            in_specs=[
                pl.BlockSpec((None, None, PC, L_in2), lambda b, t: (b, t, 0, 0)),
                pl.BlockSpec((P2 * Cout, nS), lambda b, t: (0, 0)),  # resident weights
            ],
            out_specs=pl.BlockSpec((None, None, P2 * Cout, L_out),
                                   lambda b, t: (b, t, 0, 0)),
        ),
        compiler_params=pltpu.CompilerParams(
            dimension_semantics=("parallel", "parallel"),
            vmem_limit_bytes=vmem_limit,
        ),
        cost_estimate=pl.CostEstimate(
            flops=2 * B * T * (P2 * Cout) * nS * L_out,
            transcendentals=0,
            bytes_accessed=bytes_accessed,
        ),
    )(pst, wt)

    # ---- epilogue: un-split + verbatim PyTorch phase re-interleave -----------
    out = out.reshape(B, T, P2, Cout, TH, Wsplit)[..., :Wo]   # drop junk columns
    out = jnp.transpose(out, (0, 2, 3, 1, 4, 5)).reshape(B, P2, Cout, Ho, Wo)
    z = out.reshape(B, P2 * Cout, Ho, Wo)          # torch.cat order (branch-major)
    z = z.reshape(B, Cout, p, p, Ho, Wo)
    z = jnp.transpose(z, (0, 1, 4, 2, 5, 3))
    return z.reshape(B, Cout, H, W)


# ---------------------------------------------------------------------------
# Pure-JAX reference (lax conv, f32) for correctness check
# ---------------------------------------------------------------------------
def diff_pad_conv_ref(x_nchw, weights, kernel_size, n_phase):
    B, Cin, H, W = x_nchw.shape
    P2, Cout = weights.shape[0], weights.shape[1]
    k, p = kernel_size, n_phase
    x = jnp.transpose(x_nchw, (0, 2, 3, 1))
    padding_val = list(range(k // 2, k // 2 - p, -1))
    outs = []
    for i in range(p):
        for j in range(p):
            left = padding_val[j]
            right = k - p - padding_val[j]
            top = padding_val[i]
            bottom = k - p - padding_val[i]
            xp = jnp.pad(x, ((0, 0), (top, bottom), (left, right), (0, 0)),
                         mode="edge")
            w_hwio = jnp.transpose(weights[i * p + j], (2, 3, 1, 0))
            y = lax.conv_general_dilated(
                xp, w_hwio, window_strides=(p, p), padding="VALID",
                dimension_numbers=("NHWC", "HWIO", "NHWC"))
            outs.append(jnp.transpose(y, (0, 3, 1, 2)))
    z = jnp.concatenate(outs, axis=1)
    z = z.reshape(B, Cout, p, p, H // p, W // p)
    z = jnp.transpose(z, (0, 1, 4, 2, 5, 3))
    return z.reshape(B, Cout, H, W)


# ---------------------------------------------------------------------------
if __name__ == "__main__":
    # Module defaults: bias=False, no norm/relu/prelu/drop -> pad + conv only.
    in_channel, out_channel, kernel_size, n_phase = 4, 4, 3, 2
    B, H, W = 2, 16, 16

    key = jax.random.PRNGKey(0)
    kx, kw = jax.random.split(key)
    x = jax.random.normal(kx, (B, in_channel, H, W), dtype=jnp.float32)
    weights = 0.1 * jax.random.normal(
        kw, (n_phase * n_phase, out_channel, in_channel, kernel_size, kernel_size),
        dtype=jnp.float32)

    fwd = jax.jit(functools.partial(
        diff_pad_conv, kernel_size=kernel_size, n_phase=n_phase))
    out = jax.block_until_ready(fwd(x, weights))

    # Exact-semantics f32 reference, plus a bf16-quantized-input reference
    # (the kernel intentionally feeds the MXU bf16 operands, f32 accumulation).
    ref_f32 = diff_pad_conv_ref(x, weights, kernel_size, n_phase)
    xq = x.astype(jnp.bfloat16).astype(jnp.float32)
    wq = weights.astype(jnp.bfloat16).astype(jnp.float32)
    ref_q = diff_pad_conv_ref(xq, wq, kernel_size, n_phase)

    assert out.shape == (B, out_channel, H, W), out.shape
    assert jnp.allclose(out, ref_q, atol=1e-3, rtol=1e-3), \
        "mismatch vs bf16-quantized reference"
    assert jnp.allclose(out, ref_f32, atol=1e-1, rtol=1e-1), \
        "mismatch vs f32 reference"

    print("KERNEL_OK")
</pallas_src>

<mosaic_0001>
module attributes {stable_mosaic.version = 11 : i64} {
  func.func @_fused_branch_kernel(%arg0: i32, %arg1: i32, %arg2: memref<1x1x16x82xbf16, #tpu.memory_space<vmem>>, %arg3: memref<16x64xbf16, #tpu.memory_space<vmem>>, %arg4: memref<1x1x16x72xf32, #tpu.memory_space<vmem>>) attributes {dimension_semantics = [#tpu.dimension_semantics<parallel>, #tpu.dimension_semantics<parallel>], iteration_bounds = array<i64: 2, 1>, scalar_prefetch = 0 : i64, scratch_operands = 0 : i64, tpu.core_type = #tpu.core_type<tc>, window_params = [{transform_indices = @transform_0, window_bounds = array<i64: 1, 1, 16, 82>}, {pipeline_mode = #tpu.pipeline_mode<synchronous>, transform_indices = @transform_1, window_bounds = array<i64: 16, 64>}, {transform_indices = @transform_2, window_bounds = array<i64: 1, 1, 16, 72>}]} {
    %c0 = arith.constant 0 : index
    %c0_0 = arith.constant 0 : index
    %c0_1 = arith.constant 0 : index
    %c0_2 = arith.constant 0 : index
    %0 = vector.load %arg2[%c0, %c0_0, %c0_1, %c0_2] : memref<1x1x16x82xbf16, #tpu.memory_space<vmem>>, vector<1x1x16x82xbf16>
    %1 = vector.shape_cast %0 : vector<1x1x16x82xbf16> to vector<16x82xbf16>
    %2 = vector.extract_strided_slice %1 {offsets = [0, 0], sizes = [16, 72], strides = [1, 1]} : vector<16x82xbf16> to vector<16x72xbf16>
    %3 = vector.extract_strided_slice %1 {offsets = [0, 1], sizes = [16, 72], strides = [1, 1]} : vector<16x82xbf16> to vector<16x72xbf16>
    %4 = vector.extract_strided_slice %1 {offsets = [0, 9], sizes = [16, 72], strides = [1, 1]} : vector<16x82xbf16> to vector<16x72xbf16>
    %5 = vector.extract_strided_slice %1 {offsets = [0, 10], sizes = [16, 72], strides = [1, 1]} : vector<16x82xbf16> to vector<16x72xbf16>
    %6 = tpu.concatenate %2, %3, %4, %5 in 0 : vector<16x72xbf16>, vector<16x72xbf16>, vector<16x72xbf16>, vector<16x72xbf16> -> vector<64x72xbf16>
    %c0_3 = arith.constant 0 : index
    %c0_4 = arith.constant 0 : index
    %7 = vector.load %arg3[%c0_3, %c0_4] : memref<16x64xbf16, #tpu.memory_space<vmem>>, vector<16x64xbf16>
    %cst = arith.constant dense<0.000000e+00> : vector<16x72xf32>
    %8 = tpu.matmul %7, %6, %cst {dimension_numbers = #tpu.dot_dimension_numbers<[1], [0], [0], [1], [0, 0, 1, 1], [], []>} : vector<16x64xbf16>, vector<64x72xbf16>, vector<16x72xf32> -> vector<16x72xf32>
    %c0_5 = arith.constant 0 : index
    %c0_6 = arith.constant 0 : index
    %c0_7 = arith.constant 0 : index
    %c0_8 = arith.constant 0 : index
    %9 = vector.load %arg4[%c0_5, %c0_6, %c0_7, %c0_8] : memref<1x1x16x72xf32, #tpu.memory_space<vmem>>, vector<1x1x16x72xf32>
    %10 = vector.shape_cast %9 : vector<1x1x16x72xf32> to vector<16x72xf32>
    %11 = vector.shape_cast %8 : vector<16x72xf32> to vector<1x1x16x72xf32>
    tpu.vector_store %arg4[%c0_5, %c0_6, %c0_7, %c0_8], %11 {strides = array<i32>} : memref<1x1x16x72xf32, #tpu.memory_space<vmem>>, vector<1x1x16x72xf32>,
    return
  }
  func.func @transform_0(%arg0: i32, %arg1: i32) -> (i32, i32, i32, i32) {
    %c0_i32 = arith.constant 0 : i32
    %c0_i32_0 = arith.constant 0 : i32
    %c0_i32_1 = arith.constant 0 : i32
    return %arg0, %arg1, %c0_i32, %c0_i32_0 : i32, i32, i32, i32
  }
  func.func @transform_1(%arg0: i32, %arg1: i32) -> (i32, i32) {
    %c0_i32 = arith.constant 0 : i32
    %c0_i32_0 = arith.constant 0 : i32
    %c0_i32_1 = arith.constant 0 : i32
    return %c0_i32, %c0_i32_0 : i32, i32
  }
  func.func @transform_2(%arg0: i32, %arg1: i32) -> (i32, i32, i32, i32) {
    %c0_i32 = arith.constant 0 : i32
    %c0_i32_0 = arith.constant 0 : i32
    %c0_i32_1 = arith.constant 0 : i32
    return %arg0, %arg1, %c0_i32, %c0_i32_0 : i32, i32, i32, i32
  }
}

</mosaic_0001>

<llo_original>
// kernel: diff_pad_conv.1
$region0: #{diff_pad_conv.1}
  #allocation0 [shape = 'u32[]', space=smem, size = 0x4, offset = 0x4, fixed_abs, tag = 'smem constant byte address 0x4 - core index']
  #allocation1 [shape = 'u32[144,128]{1,0:T(1,128)}', space=vmem, size = 0x12000, scoped, tag = 'internal scratch']
  %s0 = inlined_call_operand.vmem [shape: bf16[2,1,16,82], index: 0, kind: input, shape index: {}]
  %s1 = inlined_call_operand.vmem [shape: bf16[16,64], index: 1, kind: input, shape index: {}]
  %s2 = inlined_call_operand.vmem [shape: f32[2,1,16,72], index: 2, kind: output, shape index: {}]
  %s3 = sld [smem:[#allocation0]]
  $region41: #{diff_pad_conv.1} parent=0
    _
  %s5 = ssub.s32 1, %s3
  %s6 = scalar_select 0, %s5, %s3
  loop: start=0, step=1, limit=4
  $region2: #{diff_pad_conv.1} parent=0 // loop_pre_header
    _
  $region3: #{diff_pad_conv.1} parent=0 // loop_header
    %s8 = sphi 0, %s12
    %p9 = scmp.ge.s32.totalorder %s8, 4
    %s15 = sphi 0, %s27
    %s16 = sphi 0, %s23
    %s17 = sphi 0, %s15
    %s18 = sphi 0, %s16
    %s19 = sphi 0, %s17
    %s20 = sphi 0, %s18
    %s32 = sphi 0, %s34
    %s35 = sphi 0, %s32
    %s36 = sphi 0, %s35
    %s52 = sphi 0, %s36
    %s56 = sphi 0, %s56
    %s58 = sphi 0, %s56
    %s59 = sphi 0, %s58
    %s73 = sphi 0, %s59
    %s81 = sphi 0, %s83
    %s84 = sphi 0, %s81
    %s85 = sphi 0, %s84
    %s101 = sphi 0, %s85
  $region4: #{diff_pad_conv.1} parent=0 // loop_header_branch
    %11 = sbr.rel (%p9) target = $region8
  $region5: #{diff_pad_conv.1} parent=0 // loop_body
    %s13 = ssub.s32 %s8, 1
    %s14 = ssub.s32 %s8, 2
    %s21 = sadd.s32 1, %s16
    %p22 = scmp.ge.s32.totalorder %s21, 1
    %s23 = scalar_select %p22, 0, %s21
    %s24 = sadd.s32 1, %s15
    %s25 = scalar_select %p22, %s24, %s15
    %p26 = scmp.ge.s32.totalorder %s25, 2
    %s27 = scalar_select %p26, 0, %s25
    %s28 = ssub.s32 %s15, %s27
    %s29 = ssub.s32 %s16, %s23
    %s30 = sor.u32 %s28, %s29
    %p31 = scmp.eq.s32.totalorder %s30, 0
    %s33 = sadd.s32 %s32, 1
    %s34 = scalar_select %p31, %s32, %s33
    %p37 = pneg %p31
    %p38 = scmp.eq.s32.totalorder %s8, 1
    %p39 = por %p37, %p38
    %p40 = scmp.ne.s32.totalorder %s32, %s35
    %p41 = scmp.eq.s32.totalorder %s8, 0
    %p42 = por %p40, %p41
    %p43 = scmp.ne.s32.totalorder %s32, %s35
    %p44 = scmp.eq.s32.totalorder %s13, 1
    %p45 = por %p43, %p44
    %p46 = scmp.ne.s32.totalorder %s35, %s36
    %p47 = scmp.eq.s32.totalorder %s13, 0
    %p48 = por %p46, %p47
    %p49 = scmp.ne.s32.totalorder %s35, %s36
    %p50 = scmp.eq.s32.totalorder %s14, 1
    %p51 = por %p49, %p50
    %p53 = scmp.ne.s32.totalorder %s36, %s52
    %p54 = scmp.eq.s32.totalorder %s14, 0
    %p55 = por %p53, %p54
    %s57 = sadd.s32 %s56, 1
    %p60 = scmp.eq.s32.totalorder %s8, 1
    %p61 = scmp.ne.s32.totalorder %s56, %s58
    %p62 = scmp.eq.s32.totalorder %s8, 0
    %p63 = por %p61, %p62
    %p64 = scmp.ne.s32.totalorder %s56, %s58
    %p65 = scmp.eq.s32.totalorder %s13, 1
    %p66 = por %p64, %p65
    %p67 = scmp.ne.s32.totalorder %s58, %s59
    %p68 = scmp.eq.s32.totalorder %s13, 0
    %p69 = por %p67, %p68
    %p70 = scmp.ne.s32.totalorder %s58, %s59
    %p71 = scmp.eq.s32.totalorder %s14, 1
    %p72 = por %p70, %p71
    %p74 = scmp.ne.s32.totalorder %s59, %s73
    %p75 = scmp.eq.s32.totalorder %s14, 0
    %p76 = por %p74, %p75
    %s77 = ssub.s32 %s15, %s27
    %s78 = ssub.s32 %s16, %s23
    %s79 = sor.u32 %s77, %s78
    %p80 = scmp.eq.s32.totalorder %s79, 0
    %s82 = sadd.s32 %s81, 1
    %s83 = scalar_select %p80, %s81, %s82
    %p86 = pneg %p80
    %p87 = scmp.eq.s32.totalorder %s8, 1
    %p88 = por %p86, %p87
    %p89 = scmp.ne.s32.totalorder %s81, %s84
    %p90 = scmp.eq.s32.totalorder %s8, 0
    %p91 = por %p89, %p90
    %p92 = scmp.ne.s32.totalorder %s81, %s84
    %p93 = scmp.eq.s32.totalorder %s13, 1
    %p94 = por %p92, %p93
    %p95 = scmp.ne.s32.totalorder %s84, %s85
    %p96 = scmp.eq.s32.totalorder %s13, 0
    %p97 = por %p95, %p96
    %p98 = scmp.ne.s32.totalorder %s84, %s85
    %p99 = scmp.eq.s32.totalorder %s14, 1
    %p100 = por %p98, %p99
    %p102 = scmp.ne.s32.totalorder %s85, %s101
    %p103 = scmp.eq.s32.totalorder %s14, 0
    %p104 = por %p102, %p103
    %p105 = scmp.le.s32.totalorder 1, %s8
    %p106 = scmp.lt.s32.totalorder %s8, 3
    %p107 = pnand %p105, %p106
    %p108 = pneg %p107
    // Predicated region
    $region9: #{diff_pad_conv.1} parent=5 // pred_check
      _
    $region10: #{diff_pad_conv.1} parent=5 // pred_check_branch
      %110 = sbr.rel (%p107) target = $region12
    $region11: #{diff_pad_conv.1} parent=5 // pred_region
      %s111 = ssub.s32 %s8, 1
      // Predicated region
      $region13: #{diff_pad_conv.1} parent=11 // pred_check
        %p112 = pneg %p69
      $region14: #{diff_pad_conv.1} parent=11 // pred_check_branch
        %114 = sbr.rel (%p112) target = $region16
      $region15: #{diff_pad_conv.1} parent=11 // pred_region
        _
      $region16: #{diff_pad_conv.1} parent=11 // pred_fallthru
        _
    $region12: #{diff_pad_conv.1} parent=5 // pred_fallthru
      _
    %p115 = scmp.lt.s32.totalorder %s8, 2
    // Predicated region
    $region17: #{diff_pad_conv.1} parent=5 // pred_check
      %p116 = pneg %p115
    $region18: #{diff_pad_conv.1} parent=5 // pred_check_branch
      %118 = sbr.rel (%p116) target = $region20
    $region19: #{diff_pad_conv.1} parent=5 // pred_region
      // Predicated region
      $region21: #{diff_pad_conv.1} parent=19 // pred_check
        %p119 = pneg %p42
      $region22: #{diff_pad_conv.1} parent=19 // pred_check_branch
        %121 = sbr.rel (%p119) target = $region24
      $region23: #{diff_pad_conv.1} parent=19 // pred_region
        %p122 = scmp.lt.s32.totalorder %s15, 1
        %s123 = scalar_select %p122, %s15, 1
        %p124 = scmp.lt.s32.totalorder %s16, 0
        %s125 = scalar_select %p124, %s16, 0
        %s126 = smul.addr %s125, 2
        %s127 = smul.addr %s123, 2
        %s128 = sadd.s32 %s126, %s127
        %s129 = smul.addr %s128, 4
        %s130 = scalar_lea.vmem %s0, %s129
      $region24: #{diff_pad_conv.1} parent=19 // pred_fallthru
        _
    $region20: #{diff_pad_conv.1} parent=5 // pred_fallthru
      _
    %p131 = scmp.le.s32.totalorder 1, %s8
    %p132 = scmp.lt.s32.totalorder %s8, 3
    %p133 = pnand %p131, %p132
    %p134 = pneg %p133
    // Predicated region
    $region25: #{diff_pad_conv.1} parent=5 // pred_check
      _
    $region26: #{diff_pad_conv.1} parent=5 // pred_check_branch
      %136 = sbr.rel (%p133) target = $region28
    $region27: #{diff_pad_conv.1} parent=5 // pred_region
      %s137 = ssub.s32 %s8, 1
      %p138 = scmp.lt.s32.totalorder %s17, 1
      %s139 = scalar_select %p138, %s17, 1
      %p140 = scmp.lt.s32.totalorder %s18, 0
      %s141 = scalar_select %p140, %s18, 0
      %s142 = smul.addr %s141, 2
      %s143 = smul.addr %s139, 2
      %s144 = sadd.s32 %s142, %s143
      %s145 = smul.addr %s144, 4
      %s146 = scalar_lea.vmem %s0, %s145
      %p147 = pneg %p48
      %p148 = pneg %p45
      %p149 = pneg %p69
      %p150 = pneg %p66
      %p151 = pneg %p97
      %p152 = pneg %p94
      %p153 = scmp.lt.s32.totalorder %s17, 1
      %s154 = scalar_select %p153, %s17, 1
      %p155 = scmp.lt.s32.totalorder %s18, 0
      %s156 = scalar_select %p155, %s18, 0
      %s157 = smul.addr %s156, 2
      %s158 = smul.addr %s154, 2
      %s159 = sadd.s32 %s157, %s158
      %s160 = smul.addr %s159, 8
      %s161 = scalar_lea.vmem %s2, %s160
      %p162 = scmp.lt.s32.totalorder %s17, 1
      %s163 = scalar_select %p162, %s17, 1
      %p164 = scmp.lt.s32.totalorder %s18, 0
      %s165 = scalar_select %p164, %s18, 0
      %s166 = smul.addr %s165, 2
      %s167 = smul.addr %s163, 2
      %s168 = sadd.s32 %s166, %s167
      %s169 = smul.addr %s168, 4
      %s170 = scalar_lea.vmem %s0, %s169
      %p171 = scmp.lt.s32.totalorder %s17, 1
      %s172 = scalar_select %p171, %s17, 1
      %p173 = scmp.lt.s32.totalorder %s18, 0
      %s174 = scalar_select %p173, %s18, 0
      %s175 = smul.addr %s174, 2
      %s176 = smul.addr %s172, 2
      %s177 = sadd.s32 %s175, %s176
      %s178 = smul.addr %s177, 8
      %s179 = scalar_lea.vmem %s2, %s178
      %v181 = vld [vmem:[%s170] sm:$0xf]
      %v182 = vld [vmem:[%s170 + $0x4] sm:$0xf]
      %v185 = vunpack.c.l.b16 %v181
      %v186 = vunpack.c.l.b16 %v182
      %v187 = vpack.c.b16 %v186, %v185
      %189 = vrot.lane.b32.xlu0 %v187, 127
      %v190 = vpop.permute.xlu0 %189
      %192 = vrot.lane.b32.xlu0 %v187, 119
      %v193 = vpop.permute.xlu0 %192
      %195 = vrot.lane.b32.xlu0 %v187, 118
      %v196 = vpop.permute.xlu0 %195
      %v198 = vld [vmem:[%s1] sm:$0xf]
      %v199 = vld [vmem:[%s1 + $0x4] sm:$0xf]
      %v202 = vunpack.c.l.b16 %v198
      %v203 = vunpack.c.l.b16 %v199
      %v204 = vpack.c.b16 %v203, %v202
      %vm205 = vcmask 523264
      %v207 = vsel %vm205, %v204, 0
      %209 = vmatprep.subr.bf16.mxu0 0
      %210 = vmatpush1.bf16.msra.mxu0 %v187
      %211 = vmatprep.subr.bf16.mxu0 0
      %212 = vmatpush1.bf16.msra.mxu0 %v190
      %213 = vmatprep.subr.bf16.mxu0 0
      %214 = vmatpush1.bf16.msra.mxu0 %v193
      %215 = vmatprep.subr.bf16.mxu0 0
      %216 = vmatpush1.bf16.msra.mxu0 %v196
      %217 = vmatprep.subr.bf16.mxu0 0
      %218 = vmatpush1.bf16.msra.mxu0 0
      %219 = vmatprep.subr.bf16.mxu0 0
      %220 = vmatpush1.bf16.msra.mxu0 0
      %221 = vmatprep.subr.bf16.mxu0 0
      %222 = vmatpush1.bf16.msra.mxu0 0
      %223 = vmatprep.subr.bf16.mxu0 0
      %224 = vmatpush1.bf16.msra.mxu0 0
      %225 = vmatprep.subr.bf16.mxu0 0
      %226 = vmatpush1.bf16.msra.mxu0 0
      %227 = vmatprep.subr.bf16.mxu0 0
      %228 = vmatpush1.bf16.msra.mxu0 0
      %229 = vmatprep.subr.bf16.mxu0 0
      %230 = vmatpush1.bf16.msra.mxu0 0
      %231 = vmatprep.subr.bf16.mxu0 0
      %232 = vmatpush1.bf16.msra.mxu0 0
      %233 = vmatprep.subr.bf16.mxu0 0
      %234 = vmatpush1.bf16.msra.mxu0 0
      %235 = vmatprep.subr.bf16.mxu0 0
      %236 = vmatpush1.bf16.msra.mxu0 0
      %237 = vmatprep.subr.bf16.mxu0 0
      %238 = vmatpush1.bf16.msra.mxu0 0
      %239 = vmatprep.subr.bf16.mxu0 0
      %240 = vmatpush1.bf16.msra.mxu0 0
      %241 = vmatprep.mubr.bf16.mxu0 0
      %242 = vmatmul.mubr.bf16.gmra.mrb[0].mxu0 %v207
      %v243 = vpop.f32.mrb[0].mxu0
      %v244 = vadd.f32 0.0, %v243
      %v245 = vpop.f32.mrb[0].mxu0
      %v246 = vpop.f32.mrb[0].mxu0
      %v247 = vadd.f32 0.0, %v246
      %v248 = vpop.f32.mrb[0].mxu0
      %249 = vdwg.mxu0
      %vm250 = vcmask 588800
      %251 = vst.msk [vmem:[%s179] sm:$0xff] %vm250, %v244
      %252 = vst.msk [vmem:[%s179 + $0x8] sm:$0xff] %vm250, %v247
      %p253 = scmp.lt.s32.totalorder %s17, 1
      %s254 = scalar_select %p253, %s17, 1
      %p255 = scmp.lt.s32.totalorder %s18, 0
      %s256 = scalar_select %p255, %s18, 0
      %s257 = smul.addr %s256, 2
      %s258 = smul.addr %s254, 2
      %s259 = sadd.s32 %s257, %s258
      %s260 = smul.addr %s259, 8
      %s261 = scalar_lea.vmem %s2, %s260
      // Predicated region
      $region29: #{diff_pad_conv.1} parent=27 // pred_check
        %p262 = pneg %p94
      $region30: #{diff_pad_conv.1} parent=27 // pred_check_branch
        %264 = sbr.rel (%p262) target = $region32
      $region31: #{diff_pad_conv.1} parent=27 // pred_region
        _
      $region32: #{diff_pad_conv.1} parent=27 // pred_fallthru
        _
    $region28: #{diff_pad_conv.1} parent=5 // pred_fallthru
      _
    %p265 = scmp.le.s32.totalorder 2, %s8
    // Predicated region
    $region33: #{diff_pad_conv.1} parent=5 // pred_check
      %p266 = pneg %p265
    $region34: #{diff_pad_conv.1} parent=5 // pred_check_branch
      %268 = sbr.rel (%p266) target = $region36
    $region35: #{diff_pad_conv.1} parent=5 // pred_region
      %s269 = ssub.s32 %s8, 2
      // Predicated region
      $region37: #{diff_pad_conv.1} parent=35 // pred_check
        %p270 = pneg %p100
      $region38: #{diff_pad_conv.1} parent=35 // pred_check_branch
        %272 = sbr.rel (%p270) target = $region40
      $region39: #{diff_pad_conv.1} parent=35 // pred_region
        %p273 = scmp.lt.s32.totalorder %s19, 1
        %s274 = scalar_select %p273, %s19, 1
        %p275 = scmp.lt.s32.totalorder %s20, 0
        %s276 = scalar_select %p275, %s20, 0
        %s277 = smul.addr %s276, 2
        %s278 = smul.addr %s274, 2
        %s279 = sadd.s32 %s277, %s278
        %s280 = smul.addr %s279, 8
        %s281 = scalar_lea.vmem %s2, %s280
      $region40: #{diff_pad_conv.1} parent=35 // pred_fallthru
        _
    $region36: #{diff_pad_conv.1} parent=5 // pred_fallthru
      _
  $region6: #{diff_pad_conv.1} parent=0 // loop_footer
    %s12 = sadd.s32 1, %s8
  $region7: #{diff_pad_conv.1} parent=0 // loop_footer_branch
    %7 = sbr.rel target = $region3
  $region8: #{diff_pad_conv.1} parent=0 // loop_exit
    _

</llo_original>
